<compile_context>
chip_gen: v5e
topology: v5e:2x2
jax: 0.10.0
libtpu: 0.0.40
codegen_flags: <defaults>
</compile_context>

<pallas_src>
import functools

import jax
import jax.numpy as jnp
from jax import lax
from jax.experimental import pallas as pl
from jax.experimental.pallas import tpu as pltpu

EPS = 1e-5


def _vmem_capacity_bytes():
    """Physical VMEM per TensorCore; conservative 64 MiB (v7x) fallback."""
    try:
        cap = getattr(pltpu.get_tpu_info(), "vmem_capacity_bytes", None)
        if cap:
            return int(cap)
    except Exception:
        pass
    return 64 * 1024 * 1024


# ---------------------------------------------------------------------------
# Fused kernel (main path): whole instances resident in VMEM per grid step.
# x1/x2/o blocks: (bblk, R, k*E) with R = P // k; gamma/beta blocks: (1, E).
# ---------------------------------------------------------------------------
def _fused_kernel(x1_ref, x2_ref, gamma_ref, beta_ref, o_ref, *, k, n_problem):
    f32 = jnp.float32
    inv_n = f32(1.0 / n_problem)

    # Pass 1: per-(batch, channel) mean. The add is recomputed per pass so
    # the full-block f32 value never lives across a reduction (no spill).
    s1 = jnp.sum(x1_ref[...].astype(f32) + x2_ref[...].astype(f32),
                 axis=1, keepdims=True)                        # (bb, 1, k*E)
    e = s1.shape[-1] // k
    if k > 1:  # fold the k lane groups down to per-channel sums
        s1 = sum(s1[:, :, gi * e:(gi + 1) * e] for gi in range(k))
    mean = s1 * inv_n                                          # (bb, 1, E)
    mean_l = jnp.concatenate([mean] * k, axis=-1) if k > 1 else mean

    # Pass 2: biased variance around the mean (two-pass -> no cancellation).
    d = (x1_ref[...].astype(f32) + x2_ref[...].astype(f32)) - mean_l
    s2 = jnp.sum(d * d, axis=1, keepdims=True)
    if k > 1:
        s2 = sum(s2[:, :, gi * e:(gi + 1) * e] for gi in range(k))
    inv = lax.rsqrt(s2 * inv_n + EPS)                          # (bb, 1, E)

    gamma = gamma_ref[...].astype(f32)                         # (1, E)
    beta = beta_ref[...].astype(f32)
    a = inv * gamma                                            # (bb, 1, E)
    b = beta - mean * a
    if k > 1:
        a = jnp.concatenate([a] * k, axis=-1)
        b = jnp.concatenate([b] * k, axis=-1)

    # Pass 3: recompute the add, fused scale+shift, single lane-dense store.
    o_ref[...] = ((x1_ref[...].astype(f32) + x2_ref[...].astype(f32)) * a
                  + b).astype(o_ref.dtype)


# ---------------------------------------------------------------------------
# Large-P fallback, kernel 1: accumulate per-(batch, channel) sums over R
# blocks (accumulator pattern) and emit the fused scale/shift at the last
# R step.  x1/x2 blocks: (1, rblk, k*E); a/b outputs: (1, 1, E).
# ---------------------------------------------------------------------------
def _stats_kernel(x1_ref, x2_ref, gamma_ref, beta_ref, a_ref, b_ref,
                  s1_ref, s2_ref, *, k, n_problem, rblk, r_valid):
    f32 = jnp.float32
    r = pl.program_id(1)

    @pl.when(r == 0)
    def _():
        s1_ref[...] = jnp.zeros_like(s1_ref)
        s2_ref[...] = jnp.zeros_like(s2_ref)

    x = x1_ref[...].astype(f32) + x2_ref[...].astype(f32)      # (1, rblk, k*E)
    rows = lax.broadcasted_iota(jnp.int32, x.shape, 1) + r * rblk
    x = jnp.where(rows < r_valid, x, 0.0)                      # mask tail rows
    s1_ref[...] += jnp.sum(x, axis=1, keepdims=True)
    # TODO(synk): this fallback path uses single-pass E[x^2]-E[x]^2 stats;
    # switch to shifted accumulation if inputs can carry a very large offset.
    s2_ref[...] += jnp.sum(x * x, axis=1, keepdims=True)

    @pl.when(r == pl.num_programs(1) - 1)
    def _():
        s1 = s1_ref[...]
        s2 = s2_ref[...]
        e = s1.shape[-1] // k
        if k > 1:
            s1 = sum(s1[:, :, gi * e:(gi + 1) * e] for gi in range(k))
            s2 = sum(s2[:, :, gi * e:(gi + 1) * e] for gi in range(k))
        inv_n = f32(1.0 / n_problem)
        mean = s1 * inv_n
        var = jnp.maximum(s2 * inv_n - mean * mean, 0.0)
        inv = lax.rsqrt(var + EPS)
        gamma = gamma_ref[...].astype(f32)
        beta = beta_ref[...].astype(f32)
        a = inv * gamma
        a_ref[...] = a
        b_ref[...] = beta - mean * a


# ---------------------------------------------------------------------------
# Large-P fallback, kernel 2: blocked apply  o = (x1 + x2) * a + b.
# ---------------------------------------------------------------------------
def _apply_kernel(x1_ref, x2_ref, a_ref, b_ref, o_ref, *, k):
    f32 = jnp.float32
    a = a_ref[...]                                             # (1, 1, E)
    b = b_ref[...]
    if k > 1:
        a = jnp.concatenate([a] * k, axis=-1)
        b = jnp.concatenate([b] * k, axis=-1)
    o_ref[...] = ((x1_ref[...].astype(f32) + x2_ref[...].astype(f32)) * a
                  + b).astype(o_ref.dtype)


def add_and_norm(input1, input2, gamma, beta, *, block_bytes_cap=None):
    """added = input1 + input2, then InstanceNorm1d over the problem axis.

    input1, input2: (B, P, E); gamma, beta: (E,). Returns (B, P, E).
    `block_bytes_cap` is a test hook to force smaller blocks / the R-split.
    """
    B, P, E = input1.shape
    assert input2.shape == (B, P, E)
    assert gamma.shape == (E,) and beta.shape == (E,)

    # ---- lane packing: pack k problem rows side-by-side along lanes --------
    # Largest feasible k (E=32 -> k=4 -> 128-wide lane-dense stores); degrade
    # gracefully (k=2, k=1) when P doesn't divide, instead of dropping to k=1.
    k = 1
    if E < 128 and 128 % E == 0:
        k = 128 // E
        while k > 1 and P % k != 0:
            k //= 2
    R, L = P // k, E * k
    x1 = input1.reshape(B, R, L)               # zero-copy row-major reshape
    x2 = input2.reshape(B, R, L)
    itemsize = input1.dtype.itemsize

    # ---- generation-aware VMEM budget --------------------------------------
    vmem_cap = _vmem_capacity_bytes()          # 128 MiB v5e/v6e, 64 MiB v7x
    vmem_limit = min(vmem_cap * 3 // 4, 96 * 1024 * 1024)     # 96 / 96 / 48 MiB
    # Real per-step footprint: 3 streamed arrays x 2 pipeline buffers x block;
    # keep it near half the scoped limit to leave room for in-kernel temps.
    block_bytes_max = vmem_limit // 12         # ~8 MiB v5e/v6e, ~4 MiB v7x
    if block_bytes_cap is not None:
        block_bytes_max = min(block_bytes_max, block_bytes_cap)

    gamma2d = gamma.reshape(1, E).astype(jnp.float32)
    beta2d = beta.reshape(1, E).astype(jnp.float32)
    per_inst_bytes = R * L * itemsize

    def cparams(sem):
        return pltpu.CompilerParams(dimension_semantics=sem,
                                    vmem_limit_bytes=vmem_limit)

    if per_inst_bytes <= block_bytes_max:
        # ------------------ fused path: whole instances per block ----------
        bblk = min(B, max(1, block_bytes_max // per_inst_bytes))
        # Keep >= ~8 grid steps (>= 4 per v7x TensorCore) when blocks stay
        # >= ~1 MiB, so DMA / compute / writeback actually overlap.
        cap_bblk = max(1, pl.cdiv(B, min(B, 8)))
        if cap_bblk * per_inst_bytes >= (1 << 20):
            bblk = min(bblk, cap_bblk)
        n_steps = pl.cdiv(B, bblk)             # partial tail block is fine:
        grid = (n_steps,)                      # per-batch stats, OOB rows are
                                               # computed but never stored.
        in_block = pl.BlockSpec((bblk, R, L), lambda b: (b, 0, 0))
        if vmem_cap >= 128 * 1024 * 1024 and n_steps >= 3:
            # v5e/v6e have VMEM headroom: triple-buffer the two input streams
            # so input DMA keeps issuing while the previous output drains.
            in_block = pl.BlockSpec((bblk, R, L), lambda b: (b, 0, 0),
                                    pipeline_mode=pl.Buffered(3))

        out = pl.pallas_call(
            functools.partial(_fused_kernel, k=k, n_problem=P),
            out_shape=jax.ShapeDtypeStruct((B, R, L), input1.dtype),
            grid_spec=pltpu.PrefetchScalarGridSpec(
                num_scalar_prefetch=0,
                grid=grid,
                in_specs=[in_block,
                          in_block,
                          pl.BlockSpec((1, E), lambda b: (0, 0)),   # gamma
                          pl.BlockSpec((1, E), lambda b: (0, 0))],  # beta
                out_specs=pl.BlockSpec((bblk, R, L), lambda b: (b, 0, 0)),
            ),
            compiler_params=cparams(("parallel",)),
        )(x1, x2, gamma2d, beta2d)
    else:
        # -------------- large-P fallback: split the problem axis -----------
        rblk = max(8, (block_bytes_max // (L * itemsize)) // 8 * 8)
        rblk = min(rblk, R)                    # multiple of 8, or == R
        nr = pl.cdiv(R, rblk)

        a_arr, b_arr = pl.pallas_call(
            functools.partial(_stats_kernel, k=k, n_problem=P,
                              rblk=rblk, r_valid=R),
            out_shape=(jax.ShapeDtypeStruct((B, 1, E), jnp.float32),
                       jax.ShapeDtypeStruct((B, 1, E), jnp.float32)),
            grid_spec=pltpu.PrefetchScalarGridSpec(
                num_scalar_prefetch=0,
                grid=(B, nr),
                in_specs=[pl.BlockSpec((1, rblk, L), lambda b, r: (b, r, 0)),
                          pl.BlockSpec((1, rblk, L), lambda b, r: (b, r, 0)),
                          pl.BlockSpec((1, E), lambda b, r: (0, 0)),
                          pl.BlockSpec((1, E), lambda b, r: (0, 0))],
                out_specs=[pl.BlockSpec((1, 1, E), lambda b, r: (b, 0, 0)),
                           pl.BlockSpec((1, 1, E), lambda b, r: (b, 0, 0))],
                scratch_shapes=[pltpu.VMEM((1, 1, L), jnp.float32),
                                pltpu.VMEM((1, 1, L), jnp.float32)],
            ),
            compiler_params=cparams(("parallel", "arbitrary")),
        )(x1, x2, gamma2d, beta2d)

        out = pl.pallas_call(
            functools.partial(_apply_kernel, k=k),
            out_shape=jax.ShapeDtypeStruct((B, R, L), input1.dtype),
            grid_spec=pltpu.PrefetchScalarGridSpec(
                num_scalar_prefetch=0,
                grid=(B, nr),
                in_specs=[pl.BlockSpec((1, rblk, L), lambda b, r: (b, r, 0)),
                          pl.BlockSpec((1, rblk, L), lambda b, r: (b, r, 0)),
                          pl.BlockSpec((1, 1, E), lambda b, r: (b, 0, 0)),
                          pl.BlockSpec((1, 1, E), lambda b, r: (b, 0, 0))],
                out_specs=pl.BlockSpec((1, rblk, L), lambda b, r: (b, r, 0)),
            ),
            compiler_params=cparams(("parallel", "parallel")),
        )(x1, x2, a_arr, b_arr)

    return out.reshape(B, P, E)


def _reference(input1, input2, gamma, beta):
    x = input1.astype(jnp.float32) + input2.astype(jnp.float32)
    mean = jnp.mean(x, axis=1, keepdims=True)
    var = jnp.mean((x - mean) ** 2, axis=1, keepdims=True)
    y = (x - mean) * lax.rsqrt(var + EPS)
    return y * gamma[None, None, :] + beta[None, None, :]


if __name__ == "__main__":
    key = jax.random.PRNGKey(0)

    # (B, P, E, block_bytes_cap): small shapes exercising every code path.
    configs = [
        (2, 8, 32, None),     # lane-packed (k=4), fused path
        (2, 16, 128, None),   # k=1, fused path
        (2, 10, 32, None),    # P % 4 != 0 -> largest feasible k (=2)
        (3, 16, 32, 4096),    # fused path, partial trailing batch block
        (2, 80, 32, 4096),    # large-P fallback: stats+apply, masked tail R
    ]
    ok = True
    for (B, P, E, cap) in configs:
        key, k1, k2, k3, k4 = jax.random.split(key, 5)
        input1 = jax.random.normal(k1, (B, P, E), dtype=jnp.float32)
        input2 = jax.random.normal(k2, (B, P, E), dtype=jnp.float32)
        # InstanceNorm1d affine params (PyTorch default: weight=1, bias=0);
        # use non-trivial values to exercise the affine path.
        gamma = 1.0 + 0.1 * jax.random.normal(k3, (E,), dtype=jnp.float32)
        beta = 0.1 * jax.random.normal(k4, (E,), dtype=jnp.float32)

        out = add_and_norm(input1, input2, gamma, beta, block_bytes_cap=cap)
        jax.block_until_ready(out)

        ref = _reference(input1, input2, gamma, beta)
        if not jnp.allclose(out, ref, atol=1e-4, rtol=1e-4):
            ok = False
            print(f"MISMATCH at config {(B, P, E)}: "
                  f"max err {float(jnp.max(jnp.abs(out - ref)))}")

    assert ok, "mismatch vs reference"
    print("KERNEL_OK")
</pallas_src>

<mosaic_0001>
module attributes {stable_mosaic.version = 11 : i64} {
  func.func @_fused_kernel(%arg0: i32, %arg1: memref<2x2x128xf32, #tpu.memory_space<vmem>>, %arg2: memref<2x2x128xf32, #tpu.memory_space<vmem>>, %arg3: memref<1x32xf32, #tpu.memory_space<vmem>>, %arg4: memref<1x32xf32, #tpu.memory_space<vmem>>, %arg5: memref<2x2x128xf32, #tpu.memory_space<vmem>>) attributes {dimension_semantics = [#tpu.dimension_semantics<parallel>], iteration_bounds = array<i64: 1>, scalar_prefetch = 0 : i64, scratch_operands = 0 : i64, tpu.core_type = #tpu.core_type<tc>, window_params = [{transform_indices = @transform_0, window_bounds = array<i64: 2, 2, 128>}, {transform_indices = @transform_1, window_bounds = array<i64: 2, 2, 128>}, {pipeline_mode = #tpu.pipeline_mode<synchronous>, transform_indices = @transform_2, window_bounds = array<i64: 1, 32>}, {pipeline_mode = #tpu.pipeline_mode<synchronous>, transform_indices = @transform_3, window_bounds = array<i64: 1, 32>}, {transform_indices = @transform_4, window_bounds = array<i64: 2, 2, 128>}]} {
    %c0 = arith.constant 0 : index
    %c0_0 = arith.constant 0 : index
    %c0_1 = arith.constant 0 : index
    %0 = vector.load %arg1[%c0, %c0_0, %c0_1] : memref<2x2x128xf32, #tpu.memory_space<vmem>>, vector<2x2x128xf32>
    %c0_2 = arith.constant 0 : index
    %c0_3 = arith.constant 0 : index
    %c0_4 = arith.constant 0 : index
    %1 = vector.load %arg2[%c0_2, %c0_3, %c0_4] : memref<2x2x128xf32, #tpu.memory_space<vmem>>, vector<2x2x128xf32>
    %2 = arith.addf %0, %1 : vector<2x2x128xf32>
    %cst = arith.constant dense<0.000000e+00> : vector<2x128xf32>
    %3 = vector.multi_reduction <add>, %2, %cst [1] : vector<2x2x128xf32> to vector<2x128xf32>
    %4 = vector.shape_cast %3 : vector<2x128xf32> to vector<2x1x128xf32>
    %5 = vector.extract_strided_slice %4 {offsets = [0, 0, 0], sizes = [2, 1, 32], strides = [1, 1, 1]} : vector<2x1x128xf32> to vector<2x1x32xf32>
    %cst_5 = arith.constant 0.000000e+00 : f32
    %6 = vector.broadcast %cst_5 : f32 to vector<2x1x32xf32>
    %7 = arith.addf %6, %5 : vector<2x1x32xf32>
    %8 = vector.extract_strided_slice %4 {offsets = [0, 0, 32], sizes = [2, 1, 32], strides = [1, 1, 1]} : vector<2x1x128xf32> to vector<2x1x32xf32>
    %9 = arith.addf %7, %8 : vector<2x1x32xf32>
    %10 = vector.extract_strided_slice %4 {offsets = [0, 0, 64], sizes = [2, 1, 32], strides = [1, 1, 1]} : vector<2x1x128xf32> to vector<2x1x32xf32>
    %11 = arith.addf %9, %10 : vector<2x1x32xf32>
    %12 = vector.extract_strided_slice %4 {offsets = [0, 0, 96], sizes = [2, 1, 32], strides = [1, 1, 1]} : vector<2x1x128xf32> to vector<2x1x32xf32>
    %13 = arith.addf %11, %12 : vector<2x1x32xf32>
    %cst_6 = arith.constant 1.250000e-01 : f32
    %14 = vector.broadcast %cst_6 : f32 to vector<2x1x32xf32>
    %15 = arith.mulf %13, %14 : vector<2x1x32xf32>
    %16 = tpu.concatenate %15, %15, %15, %15 in 2 : vector<2x1x32xf32>, vector<2x1x32xf32>, vector<2x1x32xf32>, vector<2x1x32xf32> -> vector<2x1x128xf32>
    %c0_7 = arith.constant 0 : index
    %c0_8 = arith.constant 0 : index
    %c0_9 = arith.constant 0 : index
    %17 = vector.load %arg1[%c0_7, %c0_8, %c0_9] : memref<2x2x128xf32, #tpu.memory_space<vmem>>, vector<2x2x128xf32>
    %c0_10 = arith.constant 0 : index
    %c0_11 = arith.constant 0 : index
    %c0_12 = arith.constant 0 : index
    %18 = vector.load %arg2[%c0_10, %c0_11, %c0_12] : memref<2x2x128xf32, #tpu.memory_space<vmem>>, vector<2x2x128xf32>
    %19 = arith.addf %17, %18 : vector<2x2x128xf32>
    %20 = vector.broadcast %16 : vector<2x1x128xf32> to vector<2x2x128xf32>
    %21 = arith.subf %19, %20 : vector<2x2x128xf32>
    %22 = arith.mulf %21, %21 : vector<2x2x128xf32>
    %cst_13 = arith.constant dense<0.000000e+00> : vector<2x128xf32>
    %23 = vector.multi_reduction <add>, %22, %cst_13 [1] : vector<2x2x128xf32> to vector<2x128xf32>
    %24 = vector.shape_cast %23 : vector<2x128xf32> to vector<2x1x128xf32>
    %25 = vector.extract_strided_slice %24 {offsets = [0, 0, 0], sizes = [2, 1, 32], strides = [1, 1, 1]} : vector<2x1x128xf32> to vector<2x1x32xf32>
    %cst_14 = arith.constant 0.000000e+00 : f32
    %26 = vector.broadcast %cst_14 : f32 to vector<2x1x32xf32>
    %27 = arith.addf %26, %25 : vector<2x1x32xf32>
    %28 = vector.extract_strided_slice %24 {offsets = [0, 0, 32], sizes = [2, 1, 32], strides = [1, 1, 1]} : vector<2x1x128xf32> to vector<2x1x32xf32>
    %29 = arith.addf %27, %28 : vector<2x1x32xf32>
    %30 = vector.extract_strided_slice %24 {offsets = [0, 0, 64], sizes = [2, 1, 32], strides = [1, 1, 1]} : vector<2x1x128xf32> to vector<2x1x32xf32>
    %31 = arith.addf %29, %30 : vector<2x1x32xf32>
    %32 = vector.extract_strided_slice %24 {offsets = [0, 0, 96], sizes = [2, 1, 32], strides = [1, 1, 1]} : vector<2x1x128xf32> to vector<2x1x32xf32>
    %33 = arith.addf %31, %32 : vector<2x1x32xf32>
    %cst_15 = arith.constant 1.250000e-01 : f32
    %34 = vector.broadcast %cst_15 : f32 to vector<2x1x32xf32>
    %35 = arith.mulf %33, %34 : vector<2x1x32xf32>
    %cst_16 = arith.constant 9.99999974E-6 : f32
    %36 = vector.broadcast %cst_16 : f32 to vector<2x1x32xf32>
    %37 = arith.addf %35, %36 : vector<2x1x32xf32>
    %38 = math.rsqrt %37 : vector<2x1x32xf32>
    %c0_17 = arith.constant 0 : index
    %c0_18 = arith.constant 0 : index
    %39 = vector.load %arg3[%c0_17, %c0_18] : memref<1x32xf32, #tpu.memory_space<vmem>>, vector<1x32xf32>
    %c0_19 = arith.constant 0 : index
    %c0_20 = arith.constant 0 : index
    %40 = vector.load %arg4[%c0_19, %c0_20] : memref<1x32xf32, #tpu.memory_space<vmem>>, vector<1x32xf32>
    %41 = vector.shape_cast %39 : vector<1x32xf32> to vector<1x1x32xf32>
    %42 = vector.broadcast %41 : vector<1x1x32xf32> to vector<2x1x32xf32>
    %43 = arith.mulf %38, %42 : vector<2x1x32xf32>
    %44 = arith.mulf %15, %43 : vector<2x1x32xf32>
    %45 = vector.shape_cast %40 : vector<1x32xf32> to vector<1x1x32xf32>
    %46 = vector.broadcast %45 : vector<1x1x32xf32> to vector<2x1x32xf32>
    %47 = arith.subf %46, %44 : vector<2x1x32xf32>
    %48 = tpu.concatenate %43, %43, %43, %43 in 2 : vector<2x1x32xf32>, vector<2x1x32xf32>, vector<2x1x32xf32>, vector<2x1x32xf32> -> vector<2x1x128xf32>
    %49 = tpu.concatenate %47, %47, %47, %47 in 2 : vector<2x1x32xf32>, vector<2x1x32xf32>, vector<2x1x32xf32>, vector<2x1x32xf32> -> vector<2x1x128xf32>
    %c0_21 = arith.constant 0 : index
    %c0_22 = arith.constant 0 : index
    %c0_23 = arith.constant 0 : index
    %50 = vector.load %arg1[%c0_21, %c0_22, %c0_23] : memref<2x2x128xf32, #tpu.memory_space<vmem>>, vector<2x2x128xf32>
    %c0_24 = arith.constant 0 : index
    %c0_25 = arith.constant 0 : index
    %c0_26 = arith.constant 0 : index
    %51 = vector.load %arg2[%c0_24, %c0_25, %c0_26] : memref<2x2x128xf32, #tpu.memory_space<vmem>>, vector<2x2x128xf32>
    %52 = arith.addf %50, %51 : vector<2x2x128xf32>
    %53 = vector.broadcast %48 : vector<2x1x128xf32> to vector<2x2x128xf32>
    %54 = arith.mulf %52, %53 : vector<2x2x128xf32>
    %55 = vector.broadcast %49 : vector<2x1x128xf32> to vector<2x2x128xf32>
    %56 = arith.addf %54, %55 : vector<2x2x128xf32>
    %c0_27 = arith.constant 0 : index
    %c0_28 = arith.constant 0 : index
    %c0_29 = arith.constant 0 : index
    %57 = vector.load %arg5[%c0_27, %c0_28, %c0_29] : memref<2x2x128xf32, #tpu.memory_space<vmem>>, vector<2x2x128xf32>
    tpu.vector_store %arg5[%c0_27, %c0_28, %c0_29], %56 {strides = array<i32>} : memref<2x2x128xf32, #tpu.memory_space<vmem>>, vector<2x2x128xf32>,
    return
  }
  func.func @transform_0(%arg0: i32) -> (i32, i32, i32) {
    %c0_i32 = arith.constant 0 : i32
    %c0_i32_0 = arith.constant 0 : i32
    %c0_i32_1 = arith.constant 0 : i32
    return %arg0, %c0_i32, %c0_i32_0 : i32, i32, i32
  }
  func.func @transform_1(%arg0: i32) -> (i32, i32, i32) {
    %c0_i32 = arith.constant 0 : i32
    %c0_i32_0 = arith.constant 0 : i32
    %c0_i32_1 = arith.constant 0 : i32
    return %arg0, %c0_i32, %c0_i32_0 : i32, i32, i32
  }
  func.func @transform_2(%arg0: i32) -> (i32, i32) {
    %c0_i32 = arith.constant 0 : i32
    %c0_i32_0 = arith.constant 0 : i32
    %c0_i32_1 = arith.constant 0 : i32
    return %c0_i32, %c0_i32_0 : i32, i32
  }
  func.func @transform_3(%arg0: i32) -> (i32, i32) {
    %c0_i32 = arith.constant 0 : i32
    %c0_i32_0 = arith.constant 0 : i32
    %c0_i32_1 = arith.constant 0 : i32
    return %c0_i32, %c0_i32_0 : i32, i32
  }
  func.func @transform_4(%arg0: i32) -> (i32, i32, i32) {
    %c0_i32 = arith.constant 0 : i32
    %c0_i32_0 = arith.constant 0 : i32
    %c0_i32_1 = arith.constant 0 : i32
    return %arg0, %c0_i32, %c0_i32_0 : i32, i32, i32
  }
}

</mosaic_0001>

<llo_original>
// kernel: tpu_custom_call.1
$region0: #{tpu_custom_call.1}
  #allocation0 [shape = 'u32[]', space=smem, size = 0x4, offset = 0x4, fixed_abs, tag = 'smem constant byte address 0x4 - core index']
  #allocation1 [shape = 'u32[72,128]{1,0:T(1,128)}', space=vmem, size = 0x9000, scoped, tag = 'internal scratch']
  %s0 = inlined_call_operand.hbm [shape: f32[2,2,128], index: 0, kind: input, shape index: {}]
  %s1 = inlined_call_operand.hbm [shape: f32[2,2,128], index: 1, kind: input, shape index: {}]
  %s2 = inlined_call_operand.vmem [shape: f32[1,32], index: 2, kind: input, shape index: {}]
  %s3 = inlined_call_operand.vmem [shape: f32[1,32], index: 3, kind: input, shape index: {}]
  %s4 = inlined_call_operand.hbm [shape: f32[2,2,128], index: 4, kind: output, shape index: {}]
  %s5 = sld [smem:[#allocation0]]
  $region34: #{tpu_custom_call.1} parent=0
    _
  %s7 = ssub.s32 1, %s5
  %s8 = scalar_select 0, %s7, %s5
  $region1: #{tpu_custom_call.1} parent=0
    #allocation2 [shape = 'u8[2048]{0}', space=vmem, size = 0x800, scoped, tag = 'input window, operand 0, single buffered']
    #allocation3 [shape = 's32[1]{0}', space=sflag, size = 0x4, scoped, tag = 'scoped memory for tpu_custom_call.1']
    #allocation4 [shape = 's32[1]{0}', space=sflag, size = 0x4, scoped, tag = 'scoped memory for tpu_custom_call.1']
    #allocation5 [shape = 'u8[2048]{0}', space=vmem, size = 0x800, scoped, tag = 'input window, operand 1, single buffered']
    #allocation6 [shape = 's32[1]{0}', space=sflag, size = 0x4, scoped, tag = 'scoped memory for tpu_custom_call.1']
    #allocation7 [shape = 'u8[2048]{0}', space=vmem, size = 0x800, scoped, tag = 'output window, operand 0, single buffered']
    %9 = vsyncpa [#allocation3], 0
    %10 = vsyncpa [#allocation6], 0
    %11 = vsyncpa [#allocation4], 0
    // Predicated region
    $region2: #{tpu_custom_call.1} parent=1 // pred_check
      _
    $region3: #{tpu_custom_call.1} parent=1 // pred_check_branch
      %13 = sbr.rel (0) target = $region5
    $region4: #{tpu_custom_call.1} parent=1 // pred_region
      %15 = vsyncadd [#allocation3], 0
      %s16 = sshll.u32 %s0, 4
      %s17 = int_to_ptr.hbm [resolvable:$true] %s16
      %s18 = sshll.u32 [#allocation2], 4
      %s19 = int_to_ptr.vmem [resolvable:$true] %s18
      %24 = dma.hbm_to_vmem [thread:$0]  %s17, 64, %s19, [#allocation3], 32, 32, 2
    $region5: #{tpu_custom_call.1} parent=1 // pred_fallthru
      _
    // Predicated region
    $region6: #{tpu_custom_call.1} parent=1 // pred_check
      _
    $region7: #{tpu_custom_call.1} parent=1 // pred_check_branch
      %26 = sbr.rel (0) target = $region9
    $region8: #{tpu_custom_call.1} parent=1 // pred_region
      %28 = vsyncadd [#allocation6], 0
      %s29 = sshll.u32 %s1, 4
      %s30 = int_to_ptr.hbm [resolvable:$true] %s29
      %s31 = sshll.u32 [#allocation5], 4
      %s32 = int_to_ptr.vmem [resolvable:$true] %s31
      %37 = dma.hbm_to_vmem [thread:$0]  %s30, 64, %s32, [#allocation6], 32, 32, 2
    $region9: #{tpu_custom_call.1} parent=1 // pred_fallthru
      _
    // Predicated region
    $region10: #{tpu_custom_call.1} parent=1 // pred_check
      _
    $region11: #{tpu_custom_call.1} parent=1 // pred_check_branch
      %39 = sbr.rel (0) target = $region13
    $region12: #{tpu_custom_call.1} parent=1 // pred_region
      _
    $region13: #{tpu_custom_call.1} parent=1 // pred_fallthru
      _
    // Predicated region
    $region14: #{tpu_custom_call.1} parent=1 // pred_check
      _
    $region15: #{tpu_custom_call.1} parent=1 // pred_check_branch
      %41 = sbr.rel (0) target = $region17
    $region16: #{tpu_custom_call.1} parent=1 // pred_region
      _
    $region17: #{tpu_custom_call.1} parent=1 // pred_fallthru
      _
    // Predicated region
    $region18: #{tpu_custom_call.1} parent=1 // pred_check
      _
    $region19: #{tpu_custom_call.1} parent=1 // pred_check_branch
      %43 = sbr.rel (0) target = $region21
    $region20: #{tpu_custom_call.1} parent=1 // pred_region
      %45 = dma.done [#allocation3], 64
    $region21: #{tpu_custom_call.1} parent=1 // pred_fallthru
      _
    // Predicated region
    $region22: #{tpu_custom_call.1} parent=1 // pred_check
      _
    $region23: #{tpu_custom_call.1} parent=1 // pred_check_branch
      %47 = sbr.rel (0) target = $region25
    $region24: #{tpu_custom_call.1} parent=1 // pred_region
      %49 = dma.done [#allocation6], 64
    $region25: #{tpu_custom_call.1} parent=1 // pred_fallthru
      _
    %v50 = vld [vmem:[#allocation2] sm:$0x3]
    %v51 = vld [vmem:[#allocation2 + $0x2] sm:$0x3]
    %v52 = vld [vmem:[#allocation5] sm:$0x3]
    %v53 = vld [vmem:[#allocation5 + $0x2] sm:$0x3]
    %v54 = vadd.f32 %v50, %v52
    %v55 = vadd.f32 %v51, %v53
    %vm56 = vcmask 1041408
    %v57 = vsel %vm56, %v54, 0.0
    %v58 = vrot.slane %v57, 4
    %v59 = vadd.f32 %v57, %v58
    %v60 = vrot.slane %v59, 2
    %v61 = vadd.f32 %v59, %v60
    %v62 = vrot.slane %v61, 1
    %v63 = vadd.f32 %v61, %v62
    %v64 = vsel %vm56, %v55, 0.0
    %v65 = vrot.slane %v64, 4
    %v66 = vadd.f32 %v64, %v65
    %v67 = vrot.slane %v66, 2
    %v68 = vadd.f32 %v66, %v67
    %v69 = vrot.slane %v68, 1
    %v70 = vadd.f32 %v68, %v69
    %v71 = vadd.f32 %v63, 0.0
    %v72 = vadd.f32 %v70, 0.0
    %75 = vrot.lane.b32.xlu0 %v63, 96
    %v76 = vpop.permute.xlu0 %75
    %77 = vrot.lane.b32.xlu0 %v70, 96
    %v78 = vpop.permute.xlu0 %77
    %v81 = vadd.f32 %v71, %v76
    %v82 = vadd.f32 %v72, %v78
    %83 = vrot.lane.b32.xlu0 %v63, 64
    %v84 = vpop.permute.xlu0 %83
    %85 = vrot.lane.b32.xlu0 %v70, 64
    %v86 = vpop.permute.xlu0 %85
    %v89 = vadd.f32 %v81, %v84
    %v90 = vadd.f32 %v82, %v86
    %91 = vrot.lane.b32.xlu0 %v63, 32
    %v92 = vpop.permute.xlu0 %91
    %93 = vrot.lane.b32.xlu0 %v70, 32
    %v94 = vpop.permute.xlu0 %93
    %v97 = vadd.f32 %v89, %v92
    %v98 = vadd.f32 %v90, %v94
    %v99 = vmul.f32 %v97, 0.125
    %v100 = vmul.f32 %v98, 0.125
    %103 = vrot.lane.b32.xlu0 %v99, 32
    %v104 = vpop.permute.xlu0 %103
    %105 = vrot.lane.b32.xlu0 %v100, 32
    %v106 = vpop.permute.xlu0 %105
    %109 = vrot.lane.b32.xlu0 %v99, 64
    %v110 = vpop.permute.xlu0 %109
    %111 = vrot.lane.b32.xlu0 %v100, 64
    %v112 = vpop.permute.xlu0 %111
    %115 = vrot.lane.b32.xlu0 %v99, 96
    %v116 = vpop.permute.xlu0 %115
    %117 = vrot.lane.b32.xlu0 %v100, 96
    %v118 = vpop.permute.xlu0 %117
    %vm121 = vcmask 261120
    %v122 = vsel %vm121, %v99, %v104
    %v123 = vsel %vm121, %v100, %v106
    %vm124 = vcmask 523264
    %v125 = vsel %vm124, %v122, %v110
    %v126 = vsel %vm124, %v123, %v112
    %vm127 = vcmask 785408
    %v128 = vsel %vm127, %v125, %v116
    %v129 = vsel %vm127, %v126, %v118
    %v130 = vperm.slane %v128, 0
    %v131 = vperm.slane %v129, 0
    %v132 = vsub.f32 %v54, %v130
    %v133 = vsub.f32 %v55, %v131
    %v134 = vmul.f32 %v132, %v132
    %v135 = vmul.f32 %v133, %v133
    %v136 = vsel %vm56, %v134, 0.0
    %v137 = vrot.slane %v136, 4
    %v138 = vadd.f32 %v136, %v137
    %v139 = vrot.slane %v138, 2
    %v140 = vadd.f32 %v138, %v139
    %v141 = vrot.slane %v140, 1
    %v142 = vadd.f32 %v140, %v141
    %v143 = vsel %vm56, %v135, 0.0
    %v144 = vrot.slane %v143, 4
    %v145 = vadd.f32 %v143, %v144
    %v146 = vrot.slane %v145, 2
    %v147 = vadd.f32 %v145, %v146
    %v148 = vrot.slane %v147, 1
    %v149 = vadd.f32 %v147, %v148
    %v150 = vadd.f32 %v142, 0.0
    %v151 = vadd.f32 %v149, 0.0
    %154 = vrot.lane.b32.xlu0 %v142, 96
    %v155 = vpop.permute.xlu0 %154
    %156 = vrot.lane.b32.xlu0 %v149, 96
    %v157 = vpop.permute.xlu0 %156
    %v160 = vadd.f32 %v150, %v155
    %v161 = vadd.f32 %v151, %v157
    %162 = vrot.lane.b32.xlu0 %v142, 64
    %v163 = vpop.permute.xlu0 %162
    %164 = vrot.lane.b32.xlu0 %v149, 64
    %v165 = vpop.permute.xlu0 %164
    %v168 = vadd.f32 %v160, %v163
    %v169 = vadd.f32 %v161, %v165
    %170 = vrot.lane.b32.xlu0 %v142, 32
    %v171 = vpop.permute.xlu0 %170
    %172 = vrot.lane.b32.xlu0 %v149, 32
    %v173 = vpop.permute.xlu0 %172
    %v176 = vadd.f32 %v168, %v171
    %v177 = vadd.f32 %v169, %v173
    %v178 = vmul.f32 %v176, 0.125
    %v179 = vmul.f32 %v177, 0.125
    %v180 = vadd.f32 %v178, 1e-05
    %v181 = vadd.f32 %v179, 1e-05
    %v182 = vrsqrt.pop %v180
    %v183 = vmul.f32 %v182, %v180
    %v184 = vmul.f32 %v183, %v182
    %v185 = vmul.f32 0.5, %v184
    %v186 = vsub.f32 1.5, %v185
    %v187 = vmul.f32 %v182, %v186
    %vm188 = vweird.f32 %v180
    %vm189 = vweird.f32 %v182
    %vm190 = vmor %vm188, %vm189
    %v191 = vsel %vm190, %v182, %v187
    %v192 = vrsqrt.pop %v181
    %v193 = vmul.f32 %v192, %v181
    %v194 = vmul.f32 %v193, %v192
    %v195 = vmul.f32 0.5, %v194
    %v196 = vsub.f32 1.5, %v195
    %v197 = vmul.f32 %v192, %v196
    %vm198 = vweird.f32 %v181
    %vm199 = vweird.f32 %v192
    %vm200 = vmor %vm198, %vm199
    %v201 = vsel %vm200, %v192, %v197
    %v202 = vld [vmem:[%s2] sm:$0x1]
    %v203 = vld [vmem:[%s3] sm:$0x1]
    %v204 = vmul.f32 %v191, %v202
    %v205 = vmul.f32 %v201, %v202
    %v206 = vmul.f32 %v99, %v204
    %v207 = vmul.f32 %v100, %v205
    %v208 = vsub.f32 %v203, %v206
    %v209 = vsub.f32 %v203, %v207
    %212 = vrot.lane.b32.xlu0 %v204, 32
    %v213 = vpop.permute.xlu0 %212
    %214 = vrot.lane.b32.xlu0 %v205, 32
    %v215 = vpop.permute.xlu0 %214
    %218 = vrot.lane.b32.xlu0 %v204, 64
    %v219 = vpop.permute.xlu0 %218
    %220 = vrot.lane.b32.xlu0 %v205, 64
    %v221 = vpop.permute.xlu0 %220
    %224 = vrot.lane.b32.xlu0 %v204, 96
    %v225 = vpop.permute.xlu0 %224
    %226 = vrot.lane.b32.xlu0 %v205, 96
    %v227 = vpop.permute.xlu0 %226
    %v230 = vsel %vm121, %v204, %v213
    %v231 = vsel %vm121, %v205, %v215
    %v232 = vsel %vm124, %v230, %v219
    %v233 = vsel %vm124, %v231, %v221
    %v234 = vsel %vm127, %v232, %v225
    %v235 = vsel %vm127, %v233, %v227
    %v238 = vperm.slane %v208, 0
    %v239 = vperm.slane %v209, 0
    %240 = vrot.lane.b32.xlu0 %v238, 32
    %v241 = vpop.permute.xlu0 %240
    %242 = vrot.lane.b32.xlu0 %v239, 32
    %v243 = vpop.permute.xlu0 %242
    %246 = vrot.lane.b32.xlu0 %v238, 64
    %v247 = vpop.permute.xlu0 %246
    %248 = vrot.lane.b32.xlu0 %v239, 64
    %v249 = vpop.permute.xlu0 %248
    %252 = vrot.lane.b32.xlu0 %v238, 96
    %v253 = vpop.permute.xlu0 %252
    %254 = vrot.lane.b32.xlu0 %v239, 96
    %v255 = vpop.permute.xlu0 %254
    %v258 = vsel %vm121, %v208, %v241
    %v259 = vsel %vm121, %v209, %v243
    %v260 = vsel %vm124, %v258, %v247
    %v261 = vsel %vm124, %v259, %v249
    %v262 = vsel %vm127, %v260, %v253
    %v263 = vsel %vm127, %v261, %v255
    %v264 = vperm.slane %v234, 0
    %v265 = vperm.slane %v235, 0
    %v266 = vmul.f32 %v54, %v264
    %v267 = vmul.f32 %v55, %v265
    %v268 = vperm.slane %v262, 0
    %v269 = vperm.slane %v263, 0
    %v270 = vadd.f32 %v266, %v268
    %v271 = vadd.f32 %v267, %v269
    %272 = vst [vmem:[#allocation7] sm:$0x3] %v270
    %273 = vst [vmem:[#allocation7 + $0x2] sm:$0x3] %v271
    // Predicated region
    $region26: #{tpu_custom_call.1} parent=1 // pred_check
      _
    $region27: #{tpu_custom_call.1} parent=1 // pred_check_branch
      %275 = sbr.rel (0) target = $region29
    $region28: #{tpu_custom_call.1} parent=1 // pred_region
      %277 = vsyncadd [#allocation4], 0
      %s278 = sshll.u32 [#allocation7], 4
      %s279 = int_to_ptr.vmem [resolvable:$true] %s278
      %s280 = sshll.u32 %s4, 4
      %s281 = int_to_ptr.hbm [resolvable:$true] %s280
      %286 = dma.vmem_to_hbm [thread:$0]  %s279, 64, %s281, [#allocation4], 32, 32, 2
    $region29: #{tpu_custom_call.1} parent=1 // pred_fallthru
      _
    // Predicated region
    $region30: #{tpu_custom_call.1} parent=1 // pred_check
      _
    $region31: #{tpu_custom_call.1} parent=1 // pred_check_branch
      %288 = sbr.rel (0) target = $region33
    $region32: #{tpu_custom_call.1} parent=1 // pred_region
      %290 = dma.done [#allocation4], 64
    $region33: #{tpu_custom_call.1} parent=1 // pred_fallthru
      _
    %291 = vsyncpa [#allocation3], 1
    %292 = vsyncpa [#allocation6], 1
    %293 = vsyncpa [#allocation4], 1

</llo_original>
